<compile_context>
chip_gen: v5e
topology: v5e:2x2
jax: 0.10.0
libtpu: 0.0.40
codegen_flags: <defaults>
</compile_context>

<pallas_src>
import functools

import jax
import jax.numpy as jnp
from jax import lax
from jax.experimental import pallas as pl
from jax.experimental.pallas import tpu as pltpu

_LANE = 128
_SUBLANE = 8
# Kronecker pooling matrix allowed up to this many bytes; beyond it switch to the
# separable two-matmul path.
_KRON_MAX_BYTES = 2 << 20

_HAS_BUFFERED = hasattr(pl, "Buffered")


def _round_up(x, m):
    return ((x + m - 1) // m) * m


def _mask_spec(shape):
    """Full-array, grid-constant block; single-buffered when supported."""
    index_map = lambda i: (0,) * len(shape)
    if _HAS_BUFFERED:
        try:
            return pl.BlockSpec(shape, index_map, pipeline_mode=pl.Buffered(1))
        except TypeError:  # older jax without the pipeline_mode kwarg
            pass
    return pl.BlockSpec(shape, index_map)


def _vmem_capacity_bytes():
    try:
        return int(pltpu.get_tpu_info().vmem_capacity_bytes)
    except Exception:
        return 64 << 20  # v7x-class per-core VMEM; safe lower bound everywhere


def _vmem_limit(need_bytes, vmem_cap):
    hi = int(0.9 * vmem_cap)
    return int(min(hi, max(32 << 20, need_bytes + (12 << 20))))


def _pick_rows(nc, bytes_per_row, resident_bytes, vmem_cap):
    """Rows (images) per grid step, given double-buffered streaming cost/row."""
    budget = min(32 << 20, int(0.75 * vmem_cap) - resident_bytes - (8 << 20))
    budget = max(budget, 4 << 20)
    tb = max(_SUBLANE, budget // max(bytes_per_row, 1))
    tb = (tb // _SUBLANE) * _SUBLANE
    if tb >= nc:
        if nc >= 2 * _SUBLANE:
            # Keep >= 2 grid steps so a 2-TensorCore part (v7x) can split the
            # "parallel" axis across cores; harmless on v5e/v6e.
            tb = max(_SUBLANE, _round_up(nc // 2, _SUBLANE))
        else:
            tb = nc
    return int(tb)


def _pool_masks(H, W, H_out, W_out, k, pad, dtype):
    # Boundary-aware 0/1 masks over the UNPADDED extents (no padded copy of x).
    # count_include_pad=True is preserved by the single 1/(k*k) scale applied to
    # the window sums inside the kernels.
    h = jnp.arange(H)
    oh = jnp.arange(H_out) * k - pad
    A = (h[None, :] >= oh[:, None]) & (h[None, :] < oh[:, None] + k)  # (H_out, H)
    w = jnp.arange(W)
    ow = jnp.arange(W_out) * k - pad
    B = (w[:, None] >= ow[None, :]) & (w[:, None] < ow[None, :] + k)  # (W, W_out)
    return A.astype(dtype), B.astype(dtype)


def _kron_kernel(x_ref, k_ref, o_ref, *, inv_kk):
    # x_ref: (TB, H*W)   k_ref: (H*W, OUT)   o_ref: (TB, OUT)
    y = jnp.dot(x_ref[...], k_ref[...], preferred_element_type=jnp.float32)
    o_ref[...] = (y * inv_kk).astype(o_ref.dtype)


def _sep_kernel(x_ref, b_ref, a_ref, o_ref, t_ref, *, inv_kk, h, tb):
    # x_ref: (TB*H, W)  b_ref: (W, W_out)  a_ref: (H_out, H)
    # o_ref: (TB, H_out, W_out)  t_ref: (TB*H, W_out) f32 scratch
    t_ref[...] = jnp.dot(x_ref[...], b_ref[...], preferred_element_type=jnp.float32)
    a = a_ref[...].astype(jnp.float32)  # hoisted; tiny

    def body(i, carry):
        start = i * h
        if h % _SUBLANE == 0:
            start = pl.multiple_of(start, _SUBLANE)
        rows = t_ref[pl.ds(start, h), :]  # (H, W_out) f32
        y = jnp.dot(a, rows, preferred_element_type=jnp.float32)
        o_ref[i] = (y * inv_kk).astype(o_ref.dtype)
        return carry

    lax.fori_loop(0, tb, body, 0)


def avg_pool2d(x, pool_size: int, path=None):
    """PyTorch nn.AvgPool2d(pool_size, padding=pool_size // 2) on NCHW input.

    Semantics covered: stride == kernel_size, count_include_pad=True,
    ceil_mode=False (the nn.AvgPool2d defaults used by the module).
    """
    k = int(pool_size)
    pad = k // 2
    N, C, H, W = x.shape
    H_out = (H + 2 * pad - k) // k + 1
    W_out = (W + 2 * pad - k) // k + 1
    NC, HW, OUT = N * C, H * W, H_out * W_out
    x_itemsize = jnp.dtype(x.dtype).itemsize
    inv_kk = 1.0 / float(k * k)

    # 0/1 masks are exact in bf16; match bf16 activations (halves mask bytes and
    # keeps the MXU in bf16), otherwise keep f32.
    mask_dtype = jnp.bfloat16 if x.dtype == jnp.bfloat16 else jnp.float32
    mask_itemsize = jnp.dtype(mask_dtype).itemsize
    A, B = _pool_masks(H, W, H_out, W_out, k, pad, mask_dtype)

    vmem_cap = _vmem_capacity_bytes()
    resident_factor = 1 if _HAS_BUFFERED else 2  # mask buffers if not Buffered(1)

    if path is None:
        path = "kron" if HW * OUT * mask_itemsize <= _KRON_MAX_BYTES else "separable"

    if path == "kron":
        # Small images: one lane-dense MXU matmul per grid step against the
        # resident Kronecker pooling matrix K = A^T ⊗ B of shape (HW, OUT).
        Kmat = (A.T[:, None, :, None] * B[None, :, None, :]).reshape(HW, OUT)
        x_flat = x.reshape(NC, HW)  # contiguous -> free, lane-dense rows

        in_row = _round_up(HW, _LANE) * x_itemsize
        out_row = _round_up(OUT, _LANE) * x_itemsize
        resident = (_round_up(HW, _SUBLANE) * _round_up(OUT, _LANE)
                    * mask_itemsize * resident_factor)
        tb = _pick_rows(NC, 2 * (in_row + out_row), resident, vmem_cap)
        need = resident + tb * 2 * (in_row + out_row)

        kernel = functools.partial(_kron_kernel, inv_kk=inv_kk)
        out = pl.pallas_call(
            kernel,
            out_shape=jax.ShapeDtypeStruct((NC, OUT), x.dtype),
            grid=(pl.cdiv(NC, tb),),
            in_specs=[
                pl.BlockSpec((tb, HW), lambda i: (i, 0)),
                _mask_spec((HW, OUT)),
            ],
            out_specs=pl.BlockSpec((tb, OUT), lambda i: (i, 0)),
            compiler_params=pltpu.CompilerParams(
                dimension_semantics=("parallel",),
                vmem_limit_bytes=_vmem_limit(need, vmem_cap),
            ),
            cost_estimate=pl.CostEstimate(
                flops=2 * NC * HW * OUT,
                transcendentals=0,
                bytes_accessed=(NC * HW + NC * OUT) * x_itemsize
                + HW * OUT * mask_itemsize,
            ),
        )(x_flat, Kmat)
        return out.reshape(N, C, H_out, W_out)

    # Separable path (large images): X·B over W (one big lane-dense matmul per
    # block), then A·(per-image slab) over H. Resident weights are tiny and the
    # kernel stays HBM-bound.
    x_rows = x.reshape(NC * H, W)  # contiguous -> free

    in_img = H * _round_up(W, _LANE) * x_itemsize
    out_img = H_out * _round_up(W_out, _LANE) * x_itemsize
    t_img = H * _round_up(W_out, _LANE) * 4  # f32 scratch, single copy
    resident = ((_round_up(H_out, _SUBLANE) * _round_up(H, _LANE)
                 + _round_up(W, _SUBLANE) * _round_up(W_out, _LANE))
                * mask_itemsize * resident_factor)
    tb = _pick_rows(NC, 2 * (in_img + out_img) + t_img, resident, vmem_cap)
    need = resident + tb * (2 * (in_img + out_img) + t_img)

    kernel = functools.partial(_sep_kernel, inv_kk=inv_kk, h=H, tb=tb)
    out = pl.pallas_call(
        kernel,
        out_shape=jax.ShapeDtypeStruct((NC, H_out, W_out), x.dtype),
        grid=(pl.cdiv(NC, tb),),
        in_specs=[
            pl.BlockSpec((tb * H, W), lambda i: (i, 0)),
            _mask_spec((W, W_out)),
            _mask_spec((H_out, H)),
        ],
        out_specs=pl.BlockSpec((tb, H_out, W_out), lambda i: (i, 0, 0)),
        scratch_shapes=[pltpu.VMEM((tb * H, W_out), jnp.float32)],
        compiler_params=pltpu.CompilerParams(
            dimension_semantics=("parallel",),
            vmem_limit_bytes=_vmem_limit(need, vmem_cap),
        ),
        cost_estimate=pl.CostEstimate(
            flops=2 * NC * (H * W * W_out + H_out * H * W_out),
            transcendentals=0,
            bytes_accessed=(NC * HW + NC * OUT) * x_itemsize
            + (H_out * H + W * W_out) * mask_itemsize,
        ),
    )(x_rows, B, A)
    return out.reshape(N, C, H_out, W_out)


if __name__ == "__main__":
    def reference(x, k):
        pad = k // 2
        xp = jnp.pad(x, ((0, 0), (0, 0), (pad, pad), (pad, pad)))
        s = lax.reduce_window(xp, 0.0, lax.add, (1, 1, k, k), (1, 1, k, k), "VALID")
        return s / float(k * k)

    key = jax.random.PRNGKey(0)
    run = jax.jit(avg_pool2d, static_argnums=(1, 2))

    # 1) Module-sized input (batch=2, channels=4, spatial=16), pool_size=3.
    x1 = jax.random.normal(key, (2, 4, 16, 16), dtype=jnp.float32)
    y1 = jax.block_until_ready(run(x1, 3, None))
    r1 = reference(x1, 3)
    assert y1.shape == r1.shape, (y1.shape, r1.shape)
    assert jnp.allclose(y1, r1, atol=1e-5, rtol=1e-5), float(jnp.max(jnp.abs(y1 - r1)))

    # 2) Even pool size + multi-step grid with a partial last block (NC=25).
    x2 = jax.random.normal(jax.random.fold_in(key, 1), (5, 5, 16, 16), dtype=jnp.float32)
    y2 = jax.block_until_ready(run(x2, 2, None))
    r2 = reference(x2, 2)
    assert jnp.allclose(y2, r2, atol=1e-5, rtol=1e-5), float(jnp.max(jnp.abs(y2 - r2)))

    # 3) Separable (large-image) path exercised at a small shape.
    x3 = jax.random.normal(jax.random.fold_in(key, 2), (1, 2, 32, 32), dtype=jnp.float32)
    y3 = jax.block_until_ready(run(x3, 3, "separable"))
    r3 = reference(x3, 3)
    assert jnp.allclose(y3, r3, atol=1e-5, rtol=1e-5), float(jnp.max(jnp.abs(y3 - r3)))

    print("KERNEL_OK")
</pallas_src>

<mosaic_0001>
module attributes {stable_mosaic.version = 11 : i64} {
  func.func @_kron_kernel(%arg0: i32, %arg1: memref<8x256xf32, #tpu.memory_space<vmem>>, %arg2: memref<256x36xf32, #tpu.memory_space<vmem>>, %arg3: memref<8x36xf32, #tpu.memory_space<vmem>>) attributes {dimension_semantics = [#tpu.dimension_semantics<parallel>], iteration_bounds = array<i64: 1>, scalar_prefetch = 0 : i64, scratch_operands = 0 : i64, tpu.core_type = #tpu.core_type<tc>, window_params = [{transform_indices = @transform_0, window_bounds = array<i64: 8, 256>}, {pipeline_mode = #tpu.pipeline_mode<synchronous>, transform_indices = @transform_1, window_bounds = array<i64: 256, 36>}, {transform_indices = @transform_2, window_bounds = array<i64: 8, 36>}]} {
    %c0 = arith.constant 0 : index
    %c0_0 = arith.constant 0 : index
    %0 = vector.load %arg1[%c0, %c0_0] : memref<8x256xf32, #tpu.memory_space<vmem>>, vector<8x256xf32>
    %c0_1 = arith.constant 0 : index
    %c0_2 = arith.constant 0 : index
    %1 = vector.load %arg2[%c0_1, %c0_2] : memref<256x36xf32, #tpu.memory_space<vmem>>, vector<256x36xf32>
    %cst = arith.constant dense<0.000000e+00> : vector<8x36xf32>
    %2 = tpu.matmul %0, %1, %cst {dimension_numbers = #tpu.dot_dimension_numbers<[1], [0], [0], [1], [0, 0, 1, 1], [], []>} : vector<8x256xf32>, vector<256x36xf32>, vector<8x36xf32> -> vector<8x36xf32>
    %cst_3 = arith.constant 0.111111112 : f32
    %3 = vector.broadcast %cst_3 : f32 to vector<8x36xf32>
    %4 = arith.mulf %2, %3 : vector<8x36xf32>
    %c0_4 = arith.constant 0 : index
    %c0_5 = arith.constant 0 : index
    %5 = vector.load %arg3[%c0_4, %c0_5] : memref<8x36xf32, #tpu.memory_space<vmem>>, vector<8x36xf32>
    tpu.vector_store %arg3[%c0_4, %c0_5], %4 {strides = array<i32>} : memref<8x36xf32, #tpu.memory_space<vmem>>, vector<8x36xf32>,
    return
  }
  func.func @transform_0(%arg0: i32) -> (i32, i32) {
    %c0_i32 = arith.constant 0 : i32
    %c0_i32_0 = arith.constant 0 : i32
    return %arg0, %c0_i32 : i32, i32
  }
  func.func @transform_1(%arg0: i32) -> (i32, i32) {
    %c0_i32 = arith.constant 0 : i32
    %c0_i32_0 = arith.constant 0 : i32
    %c0_i32_1 = arith.constant 0 : i32
    return %c0_i32, %c0_i32_0 : i32, i32
  }
  func.func @transform_2(%arg0: i32) -> (i32, i32) {
    %c0_i32 = arith.constant 0 : i32
    %c0_i32_0 = arith.constant 0 : i32
    return %arg0, %c0_i32 : i32, i32
  }
}

</mosaic_0001>

<llo_original>
// kernel: avg_pool2d.1
$region0: #{avg_pool2d.1}
  #allocation0 [shape = 'u32[]', space=smem, size = 0x4, offset = 0x4, fixed_abs, tag = 'smem constant byte address 0x4 - core index']
  #allocation1 [shape = 'u32[72,128]{1,0:T(1,128)}', space=vmem, size = 0x9000, scoped, tag = 'internal scratch']
  %s0 = inlined_call_operand.vmem [shape: f32[8,256], index: 0, kind: input, shape index: {}]
  %s1 = inlined_call_operand.vmem [shape: f32[256,36], index: 1, kind: input, shape index: {}]
  %s2 = inlined_call_operand.vmem [shape: f32[8,36], index: 2, kind: output, shape index: {}]
  %s3 = sld [smem:[#allocation0]]
  $region18: #{avg_pool2d.1} parent=0
    _
  %s5 = ssub.s32 1, %s3
  %s6 = scalar_select 0, %s5, %s3
  // Predicated region
  $region2: #{avg_pool2d.1} parent=0 // pred_check
    _
  $region3: #{avg_pool2d.1} parent=0 // pred_check_branch
    %8 = sbr.rel (0) target = $region5
  $region4: #{avg_pool2d.1} parent=0 // pred_region
    _
  $region5: #{avg_pool2d.1} parent=0 // pred_fallthru
    _
  // Predicated region
  $region6: #{avg_pool2d.1} parent=0 // pred_check
    _
  $region7: #{avg_pool2d.1} parent=0 // pred_check_branch
    %10 = sbr.rel (0) target = $region9
  $region8: #{avg_pool2d.1} parent=0 // pred_region
    _
  $region9: #{avg_pool2d.1} parent=0 // pred_fallthru
    _
  %v11 = vld [vmem:[%s0] sm:$0xff]
  %v12 = vld [vmem:[%s0 + $0x8] sm:$0xff]
  %v13 = vld [vmem:[%s1] sm:$0xff]
  %v14 = vld [vmem:[%s1 + $0x8] sm:$0xff]
  %v15 = vld [vmem:[%s1 + $0x10] sm:$0xff]
  %v16 = vld [vmem:[%s1 + $0x18] sm:$0xff]
  %v17 = vld [vmem:[%s1 + $0x20] sm:$0xff]
  %v18 = vld [vmem:[%s1 + $0x28] sm:$0xff]
  %v19 = vld [vmem:[%s1 + $0x30] sm:$0xff]
  %v20 = vld [vmem:[%s1 + $0x38] sm:$0xff]
  %v21 = vld [vmem:[%s1 + $0x40] sm:$0xff]
  %v22 = vld [vmem:[%s1 + $0x48] sm:$0xff]
  %v23 = vld [vmem:[%s1 + $0x50] sm:$0xff]
  %v24 = vld [vmem:[%s1 + $0x58] sm:$0xff]
  %v25 = vld [vmem:[%s1 + $0x60] sm:$0xff]
  %v26 = vld [vmem:[%s1 + $0x68] sm:$0xff]
  %v27 = vld [vmem:[%s1 + $0x70] sm:$0xff]
  %v28 = vld [vmem:[%s1 + $0x78] sm:$0xff]
  %v29 = vld [vmem:[%s1 + $0x80] sm:$0xff]
  %v30 = vld [vmem:[%s1 + $0x88] sm:$0xff]
  %v31 = vld [vmem:[%s1 + $0x90] sm:$0xff]
  %v32 = vld [vmem:[%s1 + $0x98] sm:$0xff]
  %v33 = vld [vmem:[%s1 + $0xa0] sm:$0xff]
  %v34 = vld [vmem:[%s1 + $0xa8] sm:$0xff]
  %v35 = vld [vmem:[%s1 + $0xb0] sm:$0xff]
  %v36 = vld [vmem:[%s1 + $0xb8] sm:$0xff]
  %v37 = vld [vmem:[%s1 + $0xc0] sm:$0xff]
  %v38 = vld [vmem:[%s1 + $0xc8] sm:$0xff]
  %v39 = vld [vmem:[%s1 + $0xd0] sm:$0xff]
  %v40 = vld [vmem:[%s1 + $0xd8] sm:$0xff]
  %v41 = vld [vmem:[%s1 + $0xe0] sm:$0xff]
  %v42 = vld [vmem:[%s1 + $0xe8] sm:$0xff]
  %v43 = vld [vmem:[%s1 + $0xf0] sm:$0xff]
  %v44 = vld [vmem:[%s1 + $0xf8] sm:$0xff]
  %45 = vmatpush.msra.mxu0 %v28
  %46 = vmatpush.msra.mxu0 %v27
  %47 = vmatpush.msra.mxu0 %v26
  %48 = vmatpush.msra.mxu0 %v25
  %49 = vmatpush.msra.mxu0 %v24
  %50 = vmatpush.msra.mxu0 %v23
  %51 = vmatpush.msra.mxu0 %v22
  %52 = vmatpush.msra.mxu0 %v21
  %53 = vmatpush.msra.mxu0 %v20
  %54 = vmatpush.msra.mxu0 %v19
  %55 = vmatpush.msra.mxu0 %v18
  %56 = vmatpush.msra.mxu0 %v17
  %57 = vmatpush.msra.mxu0 %v16
  %58 = vmatpush.msra.mxu0 %v15
  %59 = vmatpush.msra.mxu0 %v14
  %60 = vmatpush.msra.mxu0 %v13
  %61 = vmatmul.f32.gmra.mxu0 %v11
  %v62 = vpop.f32.mrf.mxu0
  %v63 = vadd.f32 0.0, %v62
  %64 = vdwg.mxu0
  %65 = vmatpush.msra.mxu0 %v44
  %66 = vmatpush.msra.mxu0 %v43
  %67 = vmatpush.msra.mxu0 %v42
  %68 = vmatpush.msra.mxu0 %v41
  %69 = vmatpush.msra.mxu0 %v40
  %70 = vmatpush.msra.mxu0 %v39
  %71 = vmatpush.msra.mxu0 %v38
  %72 = vmatpush.msra.mxu0 %v37
  %73 = vmatpush.msra.mxu0 %v36
  %74 = vmatpush.msra.mxu0 %v35
  %75 = vmatpush.msra.mxu0 %v34
  %76 = vmatpush.msra.mxu0 %v33
  %77 = vmatpush.msra.mxu0 %v32
  %78 = vmatpush.msra.mxu0 %v31
  %79 = vmatpush.msra.mxu0 %v30
  %80 = vmatpush.msra.mxu0 %v29
  %81 = vmatmul.f32.gmra.mxu0 %v12
  %v82 = vpop.f32.mrf.mxu0
  %v83 = vadd.f32 %v63, %v82
  %84 = vdwg.mxu0
  %v85 = vmul.f32 %v83, 0.11111111
  %vm86 = vcmask 293888
  %87 = vst.msk [vmem:[%s2] sm:$0xff] %vm86, %v85
  // Predicated region
  $region10: #{avg_pool2d.1} parent=0 // pred_check
    _
  $region11: #{avg_pool2d.1} parent=0 // pred_check_branch
    %89 = sbr.rel (0) target = $region13
  $region12: #{avg_pool2d.1} parent=0 // pred_region
    _
  $region13: #{avg_pool2d.1} parent=0 // pred_fallthru
    _
  // Predicated region
  $region14: #{avg_pool2d.1} parent=0 // pred_check
    _
  $region15: #{avg_pool2d.1} parent=0 // pred_check_branch
    %91 = sbr.rel (0) target = $region17
  $region16: #{avg_pool2d.1} parent=0 // pred_region
    _
  $region17: #{avg_pool2d.1} parent=0 // pred_fallthru
    _

</llo_original>
